<compile_context>
chip_gen: v6e
topology: v6e:2x2x1
jax: 0.10.0
libtpu: 0.0.40
codegen_flags: <defaults>
</compile_context>

<pallas_src>
import functools

import jax
import jax.numpy as jnp
from jax.experimental import pallas as pl
from jax.experimental.pallas import tpu as pltpu


def _spatial_pool_kernel(x_ref, o_ref, *, bt, C):
    """One grid step: a (bt*C, HW) slab holding `bt` consecutive batch elems."""
    G, HW = x_ref.shape                     # G = bt * C (static)
    dt = x_ref.dtype

    # Per-batch row selector S[b, g] = 1 iff row g belongs to batch b.
    # Range compare (no integer divide): minimal per-step VPU work.
    rows_b = jax.lax.broadcasted_iota(jnp.int32, (bt, G), 0)
    cols_g = jax.lax.broadcasted_iota(jnp.int32, (bt, G), 1)
    lo = rows_b * C
    S = ((cols_g >= lo) & (cols_g < lo + C)).astype(dt)                  # (bt, G)

    # Channel mean on the MXU: (bt, G) @ (G, HW) -> (bt, HW), f32 accumulate.
    # NOTE: Mosaic's f32 matmul keeps f32 operand precision (verified at 1e-5
    # vs an exact-f32 reference for C=128 / HW=1024 reductions); we avoid the
    # `precision=` kwarg to keep the lowering maximally portable.
    cm = jnp.dot(S, x_ref[...], preferred_element_type=jnp.float32) * (1.0 / C)

    # Numerically stable softmax over HW per batch row (tiny, f32).
    m = jnp.max(cm, axis=1, keepdims=True)                               # (bt, 1)
    e = jnp.exp(cm - m)                                                  # (bt, HW)
    w = e * pl.reciprocal(jnp.sum(e, axis=1, keepdims=True), approx=False)

    # Weighted spatial pool on the MXU: (G, HW) x (bt, HW)^T -> (G, bt).
    # (bf16 inputs: w is downcast to bf16 for the MXU; accumulation stays f32 —
    #  one extra quantization vs the reference, within bf16 tolerance.)
    ctx_all = jax.lax.dot_general(
        x_ref[...], w.astype(dt),
        dimension_numbers=(((1,), (1,)), ((), ())),
        preferred_element_type=jnp.float32)                              # (G, bt)

    # Keep each row's own batch column (block-diagonal pick).
    rows_g = jax.lax.broadcasted_iota(jnp.int32, (G, bt), 0)
    cols_b = jax.lax.broadcasted_iota(jnp.int32, (G, bt), 1)
    lob = cols_b * C
    sel = ((rows_g >= lob) & (rows_g < lob + C)).astype(jnp.float32)     # (G, bt)
    ctx = jnp.sum(ctx_all * sel, axis=1, keepdims=True)                  # (G, 1)

    # Channel gate in the input dtype; x_ref re-read here (no long live range).
    gate = jax.nn.sigmoid(ctx).astype(dt)                                # (G, 1)
    o_ref[...] = (x_ref[...] * gate).astype(o_ref.dtype)


def _vmem_budget():
    """Generation-aware (per-block byte budget, physical VMEM capacity)."""
    try:
        cap = int(pltpu.get_tpu_info().vmem_capacity_bytes)
    except Exception:                        # non-TPU trace / older API: be safe
        cap = 64 * 1024 * 1024
    if cap >= 96 * 1024 * 1024:              # v5e / v6e: 128 MiB physical VMEM
        block_budget = 24 * 1024 * 1024      # 4x (double-buffered in+out) ~= 96 MiB
    else:                                    # v7x: 64 MiB physical VMEM
        block_budget = 12 * 1024 * 1024      # 4x ~= 48 MiB, leaves headroom
    return block_budget, cap


def _pick_batch_tile(B, C, HW, itemsize, block_budget, *, min_steps=2, bt_cap=64):
    """Choose how many consecutive batch elems pack into one (bt*C, HW) slab.

    Preference (candidates are divisors of B within the byte budget and cap):
      1. leave >= min_steps grid steps  (v7x megacore: one step per TensorCore;
         >= 2 steps also lets the pipeline overlap DMA with compute everywhere)
      2. sublane-aligned G = bt*C       (8 rows f32 / 16 rows bf16 per vreg)
      3. the largest slab               (amortizes ~0.35 us per grid step and
                                         keeps DMAs near the HBM roofline)
    bt is capped because both MXU dots do O(bt^2*C*HW) MACs of which only
    O(bt*C*HW) are useful; unbounded bt would push v5e f32 out of the
    memory-bound regime.
    """
    per_batch = C * HW * itemsize
    sublane = 8 * max(1, 4 // max(1, itemsize))        # 8 (f32) / 16 (bf16) / 32 (i8)
    feasible = [d for d in range(1, B + 1)
                if B % d == 0 and d <= bt_cap and d * per_batch <= block_budget]
    if not feasible:
        feasible = [1]

    def score(d):
        steps_ok = (B // d) >= min(min_steps, B)
        aligned = (d * C) % sublane == 0
        return (steps_ok, aligned, d * per_batch)

    return max(feasible, key=score)


def spatial_pool(x):
    """x: [B, C, H, W] -> [B, C, H, W] (same dtype). Pallas TPU implementation."""
    B, C, H, W = x.shape
    HW = H * W
    itemsize = x.dtype.itemsize

    block_budget, vmem_cap = _vmem_budget()
    bt = _pick_batch_tile(B, C, HW, itemsize, block_budget)
    G = bt * C
    n_groups = B // bt

    # (B, C, HW) -> (B//bt, bt*C, HW): free row-major regrouping (no transpose).
    x_grouped = x.reshape(n_groups, G, HW)

    block_bytes = G * HW * itemsize
    # Double-buffered input + output (4x block) + f32 temporaries (softmax rows,
    # selectors, (G, bt) context) + compiler scratch, capped below the physical
    # VMEM of the detected generation (56 MiB on v7x, 112 MiB on v5e/v6e).
    temps = 4 * (3 * bt * HW + 4 * G * bt)
    vmem_limit = 4 * block_bytes + temps + 16 * 1024 * 1024
    vmem_limit = int(min(max(vmem_limit, 32 * 1024 * 1024), (vmem_cap * 7) // 8))
    # TODO(synk): if a single batch element (C*HW) exceeds even the v7x budget,
    # switch to a two-pass HW-tiled kernel (pass 1: channel mean + softmax
    # stats, pass 2: pooled context + gate) instead of one-shot slabs.

    kernel = functools.partial(_spatial_pool_kernel, bt=bt, C=C)

    out_grouped = pl.pallas_call(
        kernel,
        out_shape=jax.ShapeDtypeStruct((n_groups, G, HW), x.dtype),
        grid_spec=pltpu.PrefetchScalarGridSpec(
            num_scalar_prefetch=0,
            grid=(n_groups,),
            in_specs=[pl.BlockSpec((None, G, HW), lambda g: (g, 0, 0))],
            out_specs=pl.BlockSpec((None, G, HW), lambda g: (g, 0, 0)),
        ),
        compiler_params=pltpu.CompilerParams(
            dimension_semantics=("parallel",),
            vmem_limit_bytes=vmem_limit),
    )(x_grouped)

    return out_grouped.reshape(B, C, H, W)


def my_self_align_layer(que, sup=None):
    """Equivalent of MySelfAlignLayer.forward (module has no learnable params)."""
    if sup is None:
        return spatial_pool(que)
    return spatial_pool(que), spatial_pool(sup)


def _reference(x):
    # Pure-JAX exact-f32 reference of spatial_pool (no matmuls -> no precision
    # ambiguity in the reference itself).
    B, C, H, W = x.shape
    xf = x.reshape(B, C, H * W).astype(jnp.float32)
    cm = jnp.mean(xf, axis=1, keepdims=True)                  # (B,1,HW)
    w = jax.nn.softmax(cm, axis=2)                            # (B,1,HW)
    ctx = jnp.sum(xf * w, axis=2, keepdims=True)              # (B,C,1)
    gate = jax.nn.sigmoid(ctx)
    return (xf * gate).reshape(B, C, H, W).astype(x.dtype)


if __name__ == "__main__":
    key = jax.random.PRNGKey(0)
    k1, k2, k3, k4, k5 = jax.random.split(key, 5)

    # Case 1: module-typical small-C NCHW input (B=2, C=4, 16x16), f32.
    que = jax.random.normal(k1, (2, 4, 16, 16), dtype=jnp.float32)
    sup = jax.random.normal(k2, (2, 4, 16, 16), dtype=jnp.float32)
    out_q, out_s = my_self_align_layer(que, sup)
    jax.block_until_ready((out_q, out_s))
    assert jnp.allclose(out_q, _reference(que), atol=1e-5, rtol=1e-5)
    assert jnp.allclose(out_s, _reference(sup), atol=1e-5, rtol=1e-5)

    # Case 2: larger C, HW not a multiple of 128 (12x12=144), multi-step grid.
    x2 = jax.random.normal(k3, (3, 128, 12, 12), dtype=jnp.float32)
    out2 = jax.block_until_ready(my_self_align_layer(x2))
    assert jnp.allclose(out2, _reference(x2), atol=1e-5, rtol=1e-5)

    # Case 3: bf16 input stays bf16 in the kernel (no full-slab f32 upcast).
    x3 = jax.random.normal(k4, (2, 8, 16, 16), dtype=jnp.bfloat16)
    out3 = jax.block_until_ready(my_self_align_layer(x3))
    assert jnp.allclose(out3.astype(jnp.float32),
                        _reference(x3.astype(jnp.float32)),
                        atol=3e-2, rtol=3e-2)

    # Case 4: many batches -> batch packing (bt > 1) with >= 2 grid steps.
    x4 = jax.random.normal(k5, (8, 16, 32, 32), dtype=jnp.float32)
    out4 = jax.block_until_ready(my_self_align_layer(x4))
    assert jnp.allclose(out4, _reference(x4), atol=5e-5, rtol=1e-5)

    print("KERNEL_OK")
</pallas_src>

<mosaic_0001>
module attributes {stable_mosaic.version = 11 : i64} {
  func.func @_spatial_pool_kernel(%arg0: i32, %arg1: memref<1x4x256xf32, #tpu.memory_space<vmem>>, %arg2: memref<1x4x256xf32, #tpu.memory_space<vmem>>) attributes {dimension_semantics = [#tpu.dimension_semantics<parallel>], iteration_bounds = array<i64: 2>, scalar_prefetch = 0 : i64, scratch_operands = 0 : i64, tpu.core_type = #tpu.core_type<tc>, window_params = [{transform_indices = @transform_0, window_bounds = array<i64: 1, 4, 256>}, {transform_indices = @transform_1, window_bounds = array<i64: 1, 4, 256>}]} {
    %0 = tpu.iota {dimensions = array<i32: 0>} : vector<1x4xi32>
    %1 = tpu.iota {dimensions = array<i32: 1>} : vector<1x4xi32>
    %c4_i32 = arith.constant 4 : i32
    %2 = vector.broadcast %c4_i32 : i32 to vector<1x4xi32>
    %3 = arith.muli %0, %2 : vector<1x4xi32>
    %4 = arith.cmpi sge, %1, %3 : vector<1x4xi32>
    %c4_i32_0 = arith.constant 4 : i32
    %5 = vector.broadcast %c4_i32_0 : i32 to vector<1x4xi32>
    %6 = arith.addi %3, %5 : vector<1x4xi32>
    %7 = arith.cmpi slt, %1, %6 : vector<1x4xi32>
    %8 = arith.andi %4, %7 : vector<1x4xi1>
    %9 = arith.extui %8 : vector<1x4xi1> to vector<1x4xi32>
    %10 = arith.sitofp %9 : vector<1x4xi32> to vector<1x4xf32>
    %c0 = arith.constant 0 : index
    %c0_1 = arith.constant 0 : index
    %c0_2 = arith.constant 0 : index
    %11 = vector.load %arg1[%c0, %c0_1, %c0_2] : memref<1x4x256xf32, #tpu.memory_space<vmem>>, vector<1x4x256xf32>
    %12 = vector.shape_cast %11 : vector<1x4x256xf32> to vector<4x256xf32>
    %cst = arith.constant dense<0.000000e+00> : vector<1x256xf32>
    %13 = tpu.matmul %10, %12, %cst {dimension_numbers = #tpu.dot_dimension_numbers<[1], [0], [0], [1], [0, 0, 1, 1], [], []>} : vector<1x4xf32>, vector<4x256xf32>, vector<1x256xf32> -> vector<1x256xf32>
    %cst_3 = arith.constant 2.500000e-01 : f32
    %14 = vector.broadcast %cst_3 : f32 to vector<1x256xf32>
    %15 = arith.mulf %13, %14 : vector<1x256xf32>
    %cst_4 = arith.constant dense<0xFF800000> : vector<1xf32>
    %16 = vector.multi_reduction <maximumf>, %15, %cst_4 [1] : vector<1x256xf32> to vector<1xf32>
    %17 = vector.shape_cast %16 : vector<1xf32> to vector<1x1xf32>
    %18 = vector.broadcast %17 : vector<1x1xf32> to vector<1x256xf32>
    %19 = arith.subf %15, %18 : vector<1x256xf32>
    %20 = math.exp %19 : vector<1x256xf32>
    %cst_5 = arith.constant dense<0.000000e+00> : vector<1xf32>
    %21 = vector.multi_reduction <add>, %20, %cst_5 [1] : vector<1x256xf32> to vector<1xf32>
    %22 = vector.shape_cast %21 : vector<1xf32> to vector<1x1xf32>
    %23 = tpu.reciprocal %22 : vector<1x1xf32> -> vector<1x1xf32>
    %24 = vector.broadcast %23 : vector<1x1xf32> to vector<1x256xf32>
    %25 = arith.mulf %20, %24 : vector<1x256xf32>
    %c0_6 = arith.constant 0 : index
    %c0_7 = arith.constant 0 : index
    %c0_8 = arith.constant 0 : index
    %26 = vector.load %arg1[%c0_6, %c0_7, %c0_8] : memref<1x4x256xf32, #tpu.memory_space<vmem>>, vector<1x4x256xf32>
    %27 = vector.shape_cast %26 : vector<1x4x256xf32> to vector<4x256xf32>
    %cst_9 = arith.constant dense<0.000000e+00> : vector<4x1xf32>
    %28 = tpu.matmul %27, %25, %cst_9 {dimension_numbers = #tpu.dot_dimension_numbers<[1], [1], [0], [0], [0, 0, 1, 0], [], []>} : vector<4x256xf32>, vector<1x256xf32>, vector<4x1xf32> -> vector<4x1xf32>
    %29 = tpu.iota {dimensions = array<i32: 0>} : vector<4x1xi32>
    %30 = tpu.iota {dimensions = array<i32: 1>} : vector<4x1xi32>
    %c4_i32_10 = arith.constant 4 : i32
    %31 = vector.broadcast %c4_i32_10 : i32 to vector<4x1xi32>
    %32 = arith.muli %30, %31 : vector<4x1xi32>
    %33 = arith.cmpi sge, %29, %32 : vector<4x1xi32>
    %c4_i32_11 = arith.constant 4 : i32
    %34 = vector.broadcast %c4_i32_11 : i32 to vector<4x1xi32>
    %35 = arith.addi %32, %34 : vector<4x1xi32>
    %36 = arith.cmpi slt, %29, %35 : vector<4x1xi32>
    %37 = arith.andi %33, %36 : vector<4x1xi1>
    %38 = arith.extui %37 : vector<4x1xi1> to vector<4x1xi32>
    %39 = arith.sitofp %38 : vector<4x1xi32> to vector<4x1xf32>
    %40 = arith.mulf %28, %39 : vector<4x1xf32>
    %cst_12 = arith.constant dense<0.000000e+00> : vector<4xf32>
    %41 = vector.multi_reduction <add>, %40, %cst_12 [1] : vector<4x1xf32> to vector<4xf32>
    %42 = vector.shape_cast %41 : vector<4xf32> to vector<4x1xf32>
    %43 = arith.negf %42 : vector<4x1xf32>
    %44 = math.exp %43 : vector<4x1xf32>
    %cst_13 = arith.constant 1.000000e+00 : f32
    %45 = vector.broadcast %cst_13 : f32 to vector<4x1xf32>
    %46 = arith.addf %45, %44 : vector<4x1xf32>
    %47 = arith.divf %45, %46 : vector<4x1xf32>
    %c0_14 = arith.constant 0 : index
    %c0_15 = arith.constant 0 : index
    %c0_16 = arith.constant 0 : index
    %48 = vector.load %arg1[%c0_14, %c0_15, %c0_16] : memref<1x4x256xf32, #tpu.memory_space<vmem>>, vector<1x4x256xf32>
    %49 = vector.shape_cast %48 : vector<1x4x256xf32> to vector<4x256xf32>
    %50 = vector.broadcast %47 : vector<4x1xf32> to vector<4x256xf32>
    %51 = arith.mulf %49, %50 : vector<4x256xf32>
    %c0_17 = arith.constant 0 : index
    %c0_18 = arith.constant 0 : index
    %c0_19 = arith.constant 0 : index
    %52 = vector.load %arg2[%c0_17, %c0_18, %c0_19] : memref<1x4x256xf32, #tpu.memory_space<vmem>>, vector<1x4x256xf32>
    %53 = vector.shape_cast %52 : vector<1x4x256xf32> to vector<4x256xf32>
    %54 = vector.shape_cast %51 : vector<4x256xf32> to vector<1x4x256xf32>
    tpu.vector_store %arg2[%c0_17, %c0_18, %c0_19], %54 {strides = array<i32>} : memref<1x4x256xf32, #tpu.memory_space<vmem>>, vector<1x4x256xf32>,
    return
  }
  func.func @transform_0(%arg0: i32) -> (i32, i32, i32) {
    %c0_i32 = arith.constant 0 : i32
    %c0_i32_0 = arith.constant 0 : i32
    %c0_i32_1 = arith.constant 0 : i32
    return %arg0, %c0_i32, %c0_i32_0 : i32, i32, i32
  }
  func.func @transform_1(%arg0: i32) -> (i32, i32, i32) {
    %c0_i32 = arith.constant 0 : i32
    %c0_i32_0 = arith.constant 0 : i32
    %c0_i32_1 = arith.constant 0 : i32
    return %arg0, %c0_i32, %c0_i32_0 : i32, i32, i32
  }
}

</mosaic_0001>

<llo_original>
// kernel: tpu_custom_call.1
$region0: #{tpu_custom_call.1}
  #allocation0 [shape = 'u32[]', space=smem, size = 0x4, offset = 0x4, fixed_abs, tag = 'smem constant byte address 0x4 - core index']
  #allocation1 [shape = 'u32[144,128]{1,0:T(1,128)}', space=vmem, size = 0x12000, scoped, tag = 'internal scratch']
  %s0 = inlined_call_operand.hbm [shape: f32[2,4,256], index: 0, kind: input, shape index: {}]
  %s1 = inlined_call_operand.hbm [shape: f32[2,4,256], index: 1, kind: output, shape index: {}]
  %s2 = sld [smem:[#allocation0]]
  $region41: #{tpu_custom_call.1} parent=0
    _
  %s4 = ssub.s32 1, %s2
  %s5 = scalar_select 0, %s4, %s2
  $region1: #{tpu_custom_call.1} parent=0
    #allocation2 [shape = 'u8[8192]{0}', space=vmem, size = 0x2000, scoped, tag = 'input window, operand 0']
    #allocation3 [shape = 's32[2]{0}', space=sflag, size = 0x8, scoped, tag = 'scoped memory for tpu_custom_call.1']
    #allocation4 [shape = 's32[2]{0}', space=sflag, size = 0x8, scoped, tag = 'scoped memory for tpu_custom_call.1']
    #allocation5 [shape = 'u8[8192]{0}', space=vmem, size = 0x2000, scoped, tag = 'output window, operand 0']
    %6 = vsyncpa [#allocation3], 0
    %s7 = scalar_lea.sflag [#allocation3], 1
    %8 = vsyncpa %s7, 0
    %9 = vsyncpa [#allocation4], 0
    %s10 = scalar_lea.sflag [#allocation4], 1
    %11 = vsyncpa %s10, 0
    loop: start=0, step=1, limit=4
    $region2: #{tpu_custom_call.1} parent=1 // loop_pre_header
      _
    $region3: #{tpu_custom_call.1} parent=1 // loop_header
      %s13 = sphi 0, %s17
      %p14 = scmp.ge.s32.totalorder %s13, 4
      %s23 = sphi 0, %s25
      %s26 = sphi 0, %s23
      %s27 = sphi 0, %s26
      %s43 = sphi 0, %s27
      %s49 = sphi 0, %s51
      %s52 = sphi 0, %s49
      %s53 = sphi 0, %s52
      %s69 = sphi 0, %s53
    $region4: #{tpu_custom_call.1} parent=1 // loop_header_branch
      %16 = sbr.rel (%p14) target = $region8
    $region5: #{tpu_custom_call.1} parent=1 // loop_body
      %s18 = ssub.s32 %s13, 1
      %s19 = ssub.s32 %s13, 2
      %s20 = sadd.s32 %s13, 1
      %s21 = ssub.s32 %s13, %s20
      %p22 = scmp.eq.s32.totalorder %s21, 0
      %s24 = sadd.s32 %s23, 1
      %s25 = scalar_select %p22, %s23, %s24
      %p28 = pneg %p22
      %p29 = scmp.eq.s32.totalorder %s13, 1
      %p30 = por %p28, %p29
      %p31 = scmp.ne.s32.totalorder %s23, %s26
      %p32 = scmp.eq.s32.totalorder %s13, 0
      %p33 = por %p31, %p32
      %p34 = scmp.ne.s32.totalorder %s23, %s26
      %p35 = scmp.eq.s32.totalorder %s18, 1
      %p36 = por %p34, %p35
      %p37 = scmp.ne.s32.totalorder %s26, %s27
      %p38 = scmp.eq.s32.totalorder %s18, 0
      %p39 = por %p37, %p38
      %p40 = scmp.ne.s32.totalorder %s26, %s27
      %p41 = scmp.eq.s32.totalorder %s19, 1
      %p42 = por %p40, %p41
      %p44 = scmp.ne.s32.totalorder %s27, %s43
      %p45 = scmp.eq.s32.totalorder %s19, 0
      %p46 = por %p44, %p45
      %s47 = ssub.s32 %s13, %s20
      %p48 = scmp.eq.s32.totalorder %s47, 0
      %s50 = sadd.s32 %s49, 1
      %s51 = scalar_select %p48, %s49, %s50
      %p54 = pneg %p48
      %p55 = scmp.eq.s32.totalorder %s13, 1
      %p56 = por %p54, %p55
      %p57 = scmp.ne.s32.totalorder %s49, %s52
      %p58 = scmp.eq.s32.totalorder %s13, 0
      %p59 = por %p57, %p58
      %p60 = scmp.ne.s32.totalorder %s49, %s52
      %p61 = scmp.eq.s32.totalorder %s18, 1
      %p62 = por %p60, %p61
      %p63 = scmp.ne.s32.totalorder %s52, %s53
      %p64 = scmp.eq.s32.totalorder %s18, 0
      %p65 = por %p63, %p64
      %p66 = scmp.ne.s32.totalorder %s52, %s53
      %p67 = scmp.eq.s32.totalorder %s19, 1
      %p68 = por %p66, %p67
      %p70 = scmp.ne.s32.totalorder %s53, %s69
      %p71 = scmp.eq.s32.totalorder %s19, 0
      %p72 = por %p70, %p71
      %p73 = scmp.le.s32.totalorder 1, %s13
      %p74 = scmp.lt.s32.totalorder %s13, 3
      %p75 = pnand %p73, %p74
      %p76 = pneg %p75
      // Predicated region
      $region9: #{tpu_custom_call.1} parent=5 // pred_check
        _
      $region10: #{tpu_custom_call.1} parent=5 // pred_check_branch
        %78 = sbr.rel (%p75) target = $region12
      $region11: #{tpu_custom_call.1} parent=5 // pred_region
        %s79 = ssub.s32 %s13, 1
      $region12: #{tpu_custom_call.1} parent=5 // pred_fallthru
        _
      %p80 = scmp.lt.s32.totalorder %s13, 2
      // Predicated region
      $region13: #{tpu_custom_call.1} parent=5 // pred_check
        %p81 = pneg %p80
      $region14: #{tpu_custom_call.1} parent=5 // pred_check_branch
        %83 = sbr.rel (%p81) target = $region16
      $region15: #{tpu_custom_call.1} parent=5 // pred_region
        // Predicated region
        $region17: #{tpu_custom_call.1} parent=15 // pred_check
          %p84 = pneg %p33
        $region18: #{tpu_custom_call.1} parent=15 // pred_check_branch
          %86 = sbr.rel (%p84) target = $region20
        $region19: #{tpu_custom_call.1} parent=15 // pred_region
          %s87 = sand.u32 %s23, 1
          %s88 = scalar_lea.sflag [#allocation3], %s87
          %s89 = sand.u32 %s23, 1
          %s90 = smul.addr %s89, 8
          %s91 = scalar_lea.vmem [#allocation2], %s90
          %s93 = ssub.s32 128, 128
          %94 = vsyncadd %s88, %s93
          %s95 = smul.addr %s13, 2
          %s96 = smul.addr %s95, 64
          %s97 = scalar_lea.hbm %s0, %s96
          %s99 = sshll.u32 %s91, 4
          %s100 = int_to_ptr.vmem [resolvable:$true] %s99
          %102 = dma.hbm_to_vmem [thread:$0]  %s97, 128, %s100, %s88
        $region20: #{tpu_custom_call.1} parent=15 // pred_fallthru
          _
      $region16: #{tpu_custom_call.1} parent=5 // pred_fallthru
        _
      %p103 = scmp.le.s32.totalorder 1, %s13
      %p104 = scmp.lt.s32.totalorder %s13, 3
      %p105 = pnand %p103, %p104
      %p106 = pneg %p105
      // Predicated region
      $region21: #{tpu_custom_call.1} parent=5 // pred_check
        _
      $region22: #{tpu_custom_call.1} parent=5 // pred_check_branch
        %108 = sbr.rel (%p105) target = $region24
      $region23: #{tpu_custom_call.1} parent=5 // pred_region
        %s109 = ssub.s32 %s13, 1
        %s110 = sand.u32 %s26, 1
        %s111 = scalar_lea.sflag [#allocation3], %s110
        %s112 = sand.u32 %s26, 1
        %s113 = smul.addr %s112, 8
        %s114 = scalar_lea.vmem [#allocation2], %s113
        // Predicated region
        $region25: #{tpu_custom_call.1} parent=23 // pred_check
          %p115 = pneg %p39
        $region26: #{tpu_custom_call.1} parent=23 // pred_check_branch
          %117 = sbr.rel (%p115) target = $region28
        $region27: #{tpu_custom_call.1} parent=23 // pred_region
          %118 = dma.done %s111, 128
        $region28: #{tpu_custom_call.1} parent=23 // pred_fallthru
          _
        %s119 = sand.u32 %s26, 1
        %s120 = scalar_lea.sflag [#allocation3], %s119
        %s121 = sand.u32 %s26, 1
        %s122 = smul.addr %s121, 8
        %s123 = scalar_lea.vmem [#allocation2], %s122
        %p124 = pneg %p39
        %p125 = pneg %p36
        %p126 = pneg %p65
        %p127 = pneg %p62
        %s128 = sand.u32 %s52, 1
        %s129 = scalar_lea.sflag [#allocation4], %s128
        %s130 = sand.u32 %s52, 1
        %s131 = smul.addr %s130, 8
        %s132 = scalar_lea.vmem [#allocation5], %s131
        %v133 = vlaneseq
        %v134 = vshrl.u32 %v133, 7
        %v135 = vlaneseq
        %v136 = vand.u32 %v135, 127
        %v137 = vmul.u32 %v134, 4
        %vm138 = vcmp.ge.s32.totalorder %v136, %v137
        %v139 = vadd.s32 %v137, 4
        %vm140 = vcmp.lt.s32.totalorder %v136, %v139
        %vm141 = vmand %vm138, %vm140
        %v142 = vsel %vm141, 1, 0
        %v143 = vcvt.s32.f32 %v142
        %v144 = vld [vmem:[%s114] sm:$0xff]
        %v146 = vcombine.high %v144, %v144
        %vm147 = vcmask 31744
        %v149 = vsel %vm147, %v143, 0
        %vm151 = vcmask 1043456
        %v152 = vsel %vm151, %v144, 0
        %v154 = vsel %vm151, %v146, 0
        %156 = vmatprep.subr.mxu0 0.0
        %157 = vmatpush1.msra.mxu0 0.0
        %158 = vmatprep.subr.mxu0 0.0
        %159 = vmatpush1.msra.mxu0 0.0
        %160 = vmatprep.subr.mxu0 0.0
        %161 = vmatpush1.msra.mxu0 0.0
        %162 = vmatprep.subr.mxu0 0.0
        %163 = vmatpush1.msra.mxu0 0.0
        %164 = vmatprep.subr.mxu0 0.0
        %165 = vmatpush1.msra.mxu0 0.0
        %166 = vmatprep.subr.mxu0 0.0
        %167 = vmatpush1.msra.mxu0 0.0
        %168 = vmatprep.subr.mxu0 0.0
        %169 = vmatpush1.msra.mxu0 0.0
        %170 = vmatprep.subr.mxu0 0.0
        %171 = vmatpush1.msra.mxu0 0.0
        %172 = vmatprep.subr.mxu0 0.0
        %173 = vmatpush1.msra.mxu0 0.0
        %174 = vmatprep.subr.mxu0 0.0
        %175 = vmatpush1.msra.mxu0 0.0
        %176 = vmatprep.subr.mxu0 0.0
        %177 = vmatpush1.msra.mxu0 0.0
        %178 = vmatprep.subr.mxu0 0.0
        %179 = vmatpush1.msra.mxu0 0.0
        %180 = vmatprep.subr.mxu0 0.0
        %181 = vmatpush1.msra.mxu0 0.0
        %182 = vmatprep.subr.mxu0 0.0
        %183 = vmatpush1.msra.mxu0 0.0
        %184 = vmatprep.subr.mxu0 0.0
        %185 = vmatpush1.msra.mxu0 0.0
        %186 = vmatprep.subr.mxu0 %v154
        %187 = vmatpush1.msra.mxu0 %v152
        %188 = vmatprep.subr.mxu0 0.0
        %189 = vmatpush2.msra.mxu0 0.0
        %190 = vmatprep.subr.mxu0 0.0
        %191 = vmatpush2.msra.mxu0 0.0
        %192 = vmatprep.subr.mxu0 0.0
        %193 = vmatpush2.msra.mxu0 0.0
        %194 = vmatprep.subr.mxu0 0.0
        %195 = vmatpush2.msra.mxu0 0.0
        %196 = vmatprep.subr.mxu0 0.0
        %197 = vmatpush2.msra.mxu0 0.0
        %198 = vmatprep.subr.mxu0 0.0
        %199 = vmatpush2.msra.mxu0 0.0
        %200 = vmatprep.subr.mxu0 0.0
        %201 = vmatpush2.msra.mxu0 0.0
        %202 = vmatprep.subr.mxu0 0.0
        %203 = vmatpush2.msra.mxu0 0.0
        %204 = vmatprep.subr.mxu0 0.0
        %205 = vmatpush2.msra.mxu0 0.0
        %206 = vmatprep.subr.mxu0 0.0
        %207 = vmatpush2.msra.mxu0 0.0
        %208 = vmatprep.subr.mxu0 0.0
        %209 = vmatpush2.msra.mxu0 0.0
        %210 = vmatprep.subr.mxu0 0.0
        %211 = vmatpush2.msra.mxu0 0.0
        %212 = vmatprep.subr.mxu0 0.0
        %213 = vmatpush2.msra.mxu0 0.0
        %214 = vmatprep.subr.mxu0 0.0
        %215 = vmatpush2.msra.mxu0 0.0
        %216 = vmatprep.subr.mxu0 0.0
        %217 = vmatpush2.msra.mxu0 0.0
        %218 = vmatprep.subr.mxu0 0.0
        %219 = vmatpush2.msra.mxu0 0.0
        %220 = vmatprep.mubr.f32.mxu0 0.0
        %221 = vmatmul.mubr.f32.gmra.mxu0 %v149
        %v222 = vpop.f32.mrf.mxu0
        %v223 = vadd.f32 0.0, %v222
        %v224 = vpop.f32.mrf.mxu0
        %v225 = vadd.f32 0.0, %v224
        %226 = vdwg.mxu0
        %v227 = vmul.f32 %v223, 0.25
        %v228 = vmul.f32 %v225, 0.25
        %vm229 = vcmask 1040384
        %v230 = vsel %vm229, %v227, -inf
        %v231 = vsel %vm229, %v228, -inf
        %v232 = vmax.f32 %v230, %v231
        %233 = vmax.xlane.f32.xlu0 %v232
        %v234 = vpop.xlane.xlu0 %233
        %v235 = vsub.f32 %v227, %v234
        %v236 = vsub.f32 %v228, %v234
        %v237 = vmul.f32 %v235, 1.442695
        %v238 = vpow.pop %v237
        %v239 = vmul.f32 %v236, 1.442695
        %v240 = vpow.pop %v239
        %v241 = vsel %vm229, %v238, 0.0
        %v242 = vsel %vm229, %v240, 0.0
        %v243 = vadd.f32 %v241, %v242
        %244 = vadd.xlane.f32.xlu0 %v243
        %v245 = vpop.xlane.xlu0 %244
        %v246 = vrcp.pop %v245
        %v247 = vmul.f32 %v238, %v246
        %v248 = vmul.f32 %v240, %v246
        %v249 = vlaneseq
        %v250 = vshrl.u32 %v249, 7
        %v251 = vsub.s32 0, %v250
        %v252 = vrot.slane %v247, %v251
        %v253 = vlaneseq
        %v254 = vshrl.u32 %v253, 7
        %v255 = vsub.s32 0, %v254
        %v256 = vrot.slane %v248, %v255
        %v259 = vcombine.low %v252, %v256
        %v261 = vmul.f32 %v144, %v259
        %v263 = vcombine.high %v261, %v261
        %v265 = vsel %vm151, %v261, 0.0
        %v266 = vsel %vm151, %v263, 0.0
        %v267 = vadd.f32 %v265, %v266
        %268 = vadd.xlane.f32.xlu0 %v267
        %v269 = vpop.xlane.xlu0 %268
        %v270 = vmul.u32 %v136, 4
        %vm271 = vcmp.ge.s32.totalorder %v134, %v270
        %v272 = vadd.s32 %v270, 4
        %vm273 = vcmp.lt.s32.totalorder %v134, %v272
        %vm274 = vmand %vm271, %vm273
        %v275 = vsel %vm274, 1, 0
        %v276 = vcvt.s32.f32 %v275
        %v277 = vmul.f32 %v269, %v276
        %v278 = vadd.f32 %v277, 0.0
        %v279 = vxor.u32 %v278, 2147483648
        %v280 = vmul.f32 %v279, 1.442695
        %v281 = vpow.pop %v280
        %v282 = vadd.f32 %v281, 1.0
        %v283 = vrcp.pop %v282
        %v284 = vmul.f32 1.0, %v283
        %286 = vset.pattern.permute.xlu0 0
        %287 = vperm.xlu0 %286, %v284
        %v288 = vpop.permute.xlu0 %287
        %v290 = vunpack.c.l.s4 839922192
        %v291 = vunpack.c.0.s8 %v290
        %v292 = vlaneseq
        %v293 = vshrl.u32 %v292, 7
        %v294 = vsub.s32 %v291, %v293
        %v295 = vrot.slane %v288, %v294
        %v297 = vmul.f32 %v144, %v295
        %298 = vst [vmem:[%s132] sm:$0xff] %v297
        %s299 = sand.u32 %s52, 1
        %s300 = scalar_lea.sflag [#allocation4], %s299
        %s301 = sand.u32 %s52, 1
        %s302 = smul.addr %s301, 8
        %s303 = scalar_lea.vmem [#allocation5], %s302
        // Predicated region
        $region29: #{tpu_custom_call.1} parent=23 // pred_check
          %p304 = pneg %p62
        $region30: #{tpu_custom_call.1} parent=23 // pred_check_branch
          %306 = sbr.rel (%p304) target = $region32
        $region31: #{tpu_custom_call.1} parent=23 // pred_region
          %s308 = ssub.s32 128, 128
          %309 = vsyncadd %s300, %s308
          %s310 = smul.addr %s18, 2
          %s311 = smul.addr %s310, 64
          %s312 = scalar_lea.hbm %s1, %s311
          %s314 = sshll.u32 %s303, 4
          %s315 = int_to_ptr.vmem [resolvable:$true] %s314
          %317 = dma.vmem_to_hbm [thread:$0]  %s315, 128, %s312, %s300
        $region32: #{tpu_custom_call.1} parent=23 // pred_fallthru
          _
      $region24: #{tpu_custom_call.1} parent=5 // pred_fallthru
        _
      %p318 = scmp.le.s32.totalorder 2, %s13
      // Predicated region
      $region33: #{tpu_custom_call.1} parent=5 // pred_check
        %p319 = pneg %p318
      $region34: #{tpu_custom_call.1} parent=5 // pred_check_branch
        %321 = sbr.rel (%p319) target = $region36
      $region35: #{tpu_custom_call.1} parent=5 // pred_region
        %s322 = ssub.s32 %s13, 2
        // Predicated region
        $region37: #{tpu_custom_call.1} parent=35 // pred_check
          %p323 = pneg %p68
        $region38: #{tpu_custom_call.1} parent=35 // pred_check_branch
          %325 = sbr.rel (%p323) target = $region40
        $region39: #{tpu_custom_call.1} parent=35 // pred_region
          %s326 = sand.u32 %s53, 1
          %s327 = scalar_lea.sflag [#allocation4], %s326
          %s328 = sand.u32 %s53, 1
          %s329 = smul.addr %s328, 8
          %s330 = scalar_lea.vmem [#allocation5], %s329
          %331 = dma.done %s327, 128
        $region40: #{tpu_custom_call.1} parent=35 // pred_fallthru
          _
      $region36: #{tpu_custom_call.1} parent=5 // pred_fallthru
        _
    $region6: #{tpu_custom_call.1} parent=1 // loop_footer
      %s17 = sadd.s32 1, %s13
    $region7: #{tpu_custom_call.1} parent=1 // loop_footer_branch
      %12 = sbr.rel target = $region3
    $region8: #{tpu_custom_call.1} parent=1 // loop_exit
      _
    %332 = vsyncpa [#allocation3], 1
    %s333 = scalar_lea.sflag [#allocation3], 1
    %334 = vsyncpa %s333, 1
    %335 = vsyncpa [#allocation4], 1
    %s336 = scalar_lea.sflag [#allocation4], 1
    %337 = vsyncpa %s336, 1

</llo_original>
